<compile_context>
chip_gen: v7x
topology: tpu7x:2x2x1
jax: 0.10.0
libtpu: 0.0.40
codegen_flags: <defaults>
</compile_context>

<pallas_src>
import functools

import jax
import jax.numpy as jnp
from jax.experimental import pallas as pl
from jax.experimental.pallas import tpu as pltpu


def _round_up(x, m):
    return (x + m - 1) // m * m


def _cdiv(a, b):
    return (a + b - 1) // b


def _vmem_limit_bytes():
    # Budget ~75% of physical VMEM per core (v5e/v6e: 96 MiB, v7x: 48 MiB).
    try:
        cap = pltpu.get_tpu_info().vmem_capacity_bytes
    except Exception:
        cap = 64 * 1024 * 1024
    return min(int(cap * 3 // 4), 100 * 1024 * 1024)


def _l2_normalize(x, eps=1e-12):
    # Matches torch F.normalize(x, p=2, dim=1): x / max(||x||, eps).
    # rsqrt runs on the (otherwise idle) EUP slot.
    sumsq = jnp.sum(x * x, axis=-1, keepdims=True)
    return x * jax.lax.rsqrt(jnp.maximum(sumsq, eps * eps))


# --------------------------------------------------------------------------
# Kernel 1: text branch -> transposed, temperature-scaled bf16 text embeddings
# --------------------------------------------------------------------------
def text_kernel(tok_ref, mask_ref, w_tproj_ref, b_tproj_ref, temp_ref,
                txt_embT_ref, msum_acc, cnt_acc, *, seq_len, s_chunk,
                needs_mask):
    f32 = jnp.float32
    s = pl.program_id(1)

    @pl.when(s == 0)
    def _init():
        msum_acc[...] = jnp.zeros_like(msum_acc)
        cnt_acc[...] = jnp.zeros_like(cnt_acc)

    mask = mask_ref[...]                                     # [tB, sC] f32
    if needs_mask:                                           # ragged S tail
        col = s * s_chunk + jax.lax.broadcasted_iota(jnp.int32, mask.shape, 1)
        mask = jnp.where(col < seq_len, mask, 0.0)

    # TODO(synk): BERT encoder is not translated; stand-in = attention-mask
    # weighted mean of token embeddings in place of last_hidden_state[:, 0, :].
    tok = tok_ref[...].astype(f32)                           # [tB, sC, Dt]
    msum_acc[...] += jnp.sum(tok * mask[:, :, None], axis=1)
    cnt_acc[...] += jnp.sum(mask, axis=1, keepdims=True)

    @pl.when(s == pl.num_programs(1) - 1)
    def _finish():
        txt_feat = msum_acc[...] / jnp.maximum(cnt_acc[...], 1e-9)   # [tB, Dt]
        txt_emb = jnp.dot(txt_feat.astype(jnp.bfloat16), w_tproj_ref[...],
                          preferred_element_type=f32) + b_tproj_ref[...]
        # Fold the temperature here (a scalar commutes through the logits
        # matmul) so kernel 2 skips a full [tB, B] VPU multiply.
        txt_emb = _l2_normalize(txt_emb) * temp_ref[0, 0]            # [tB, Do]
        # Transposed bf16 store -> Do is the natural K dim of the logits dot.
        txt_embT_ref[...] = txt_emb.T.astype(txt_embT_ref.dtype)     # [Do, tB]


# --------------------------------------------------------------------------
# Kernel 2: image branch + temperature-scaled logits
# --------------------------------------------------------------------------
def image_logits_kernel(images_ref, w_feat_ref, b_feat_ref, w_iproj_ref,
                        b_iproj_ref, txt_embT_ref, logits_ref, pool_acc,
                        *, hw, hw_chunk, needs_mask):
    f32 = jnp.float32
    k = pl.program_id(1)

    @pl.when(k == 0)
    def _init():
        pool_acc[...] = jnp.zeros_like(pool_acc)

    x = images_ref[...].astype(f32)                          # [tB, C, hwC] f32
    if needs_mask:                                           # ragged HW tail
        col = k * hw_chunk + jax.lax.broadcasted_iota(jnp.int32, x.shape, 2)
        x = jnp.where(col < hw, x, 0.0)

    # Lane-blocked accumulation: only cheap VPU adds per HW chunk; the single
    # cross-lane (XLU) reduce over the 128 lanes is deferred to the last chunk.
    acc = pool_acc[...]
    for j in range(hw_chunk // 128):
        acc = acc + x[:, :, j * 128:(j + 1) * 128]
    pool_acc[...] = acc                                       # [tB, C, 128]

    @pl.when(k == pl.num_programs(1) - 1)
    def _finish():
        # TODO(synk): ResNet50 tower is not translated; stand-in = global
        # average pool over spatial + linear feature head (+ ReLU).
        pooled = jnp.sum(pool_acc[...], axis=-1) * (1.0 / hw)        # [tB, C]
        img_feat = jnp.dot(pooled.astype(jnp.bfloat16), w_feat_ref[...],
                           preferred_element_type=f32) + b_feat_ref[...]
        img_feat = jnp.maximum(img_feat, 0.0)                        # [tB, Di]

        img_emb = jnp.dot(img_feat.astype(jnp.bfloat16), w_iproj_ref[...],
                          preferred_element_type=f32) + b_iproj_ref[...]
        img_emb = _l2_normalize(img_emb)                             # [tB, Do]

        # logits = image_embeddings @ (temperature * text_embeddings).T
        # (the PyTorch module multiplies the logits by self.temperature).
        logits_ref[...] = jnp.dot(img_emb.astype(jnp.bfloat16),
                                  txt_embT_ref[...],
                                  preferred_element_type=f32)        # [tB, B]


# --------------------------------------------------------------------------
# Wrapper
# --------------------------------------------------------------------------
def clip_forward(images, input_ids, attention_mask, params,
                 *, hw_chunk=1024, img_batch_tile=128, txt_batch_tile=256):
    """images: [B, C, H, W] (NCHW); input_ids / attention_mask: [B, S]."""
    f32 = jnp.float32
    d = params["dims"]
    B, C, H, W = images.shape
    S = input_ids.shape[1]
    HW = H * W
    Di, Dt, Do = d["Di"], d["Dt"], d["Do"]
    vmem_limit = _vmem_limit_bytes()

    # ---- tile selection (no host-side pad/cast of the big image tensor) ----
    img_tile = min(img_batch_tile, _round_up(B, 8))
    if _cdiv(B, img_tile) < 2 and B > 8:
        # v7x megacore: keep >=2 "parallel" batch blocks when batch allows it.
        img_tile = _round_up(_cdiv(B, 2), 8)
    hw_chunk = min(_round_up(hw_chunk, 128), _round_up(HW, 128))
    hw_mask = (HW % hw_chunk) != 0

    txt_tile = B if B < 128 else max(128, (min(txt_batch_tile, B) // 128) * 128)
    s_chunk = S if S < 128 else 128
    s_mask = (S % s_chunk) != 0

    cparams = pltpu.CompilerParams(
        dimension_semantics=("parallel", "arbitrary"),
        vmem_limit_bytes=vmem_limit)

    # ---- host-side glue: embedding gather + mask cast (tiny tensors) -------
    # TODO(synk): at real vocab/S sizes, fuse the gather into kernel 1 via
    # PrefetchScalarGridSpec (input_ids as scalar prefetch + pl.Element rows).
    tok = params["tok_emb_table"][input_ids]                 # [B, S, Dt] bf16
    mask_f = attention_mask.astype(f32)                      # [B, S]

    # ---- kernel 1: text branch -> temperature-scaled txt_embT (bf16) -------
    k1 = functools.partial(text_kernel, seq_len=S, s_chunk=s_chunk,
                           needs_mask=s_mask)
    txt_embT = pl.pallas_call(
        k1,
        out_shape=jax.ShapeDtypeStruct((Do, B), jnp.bfloat16),
        grid=(_cdiv(B, txt_tile), _cdiv(S, s_chunk)),
        in_specs=[
            pl.BlockSpec((txt_tile, s_chunk, Dt), lambda i, s: (i, s, 0)),
            pl.BlockSpec((txt_tile, s_chunk), lambda i, s: (i, s)),
            pl.BlockSpec((Dt, Do), lambda i, s: (0, 0),
                         pipeline_mode=pl.Buffered(1)),
            pl.BlockSpec((1, Do), lambda i, s: (0, 0),
                         pipeline_mode=pl.Buffered(1)),
            pl.BlockSpec(memory_space=pltpu.MemorySpace.SMEM),  # temperature
        ],
        out_specs=pl.BlockSpec((Do, txt_tile), lambda i, s: (0, i)),
        scratch_shapes=[pltpu.VMEM((txt_tile, Dt), f32),
                        pltpu.VMEM((txt_tile, 1), f32)],
        compiler_params=cparams,
    )(tok, mask_f, params["w_txt_proj"], params["b_txt_proj"],
      params["temperature"])

    # ---- kernel 2: image branch + logits ------------------------------------
    images_r = images.reshape(B, C, HW)                      # f32, no copy/cast
    k2 = functools.partial(image_logits_kernel, hw=float(HW),
                           hw_chunk=hw_chunk, needs_mask=hw_mask)
    logits = pl.pallas_call(
        k2,
        out_shape=jax.ShapeDtypeStruct((B, B), f32),
        grid=(_cdiv(B, img_tile), _cdiv(HW, hw_chunk)),
        in_specs=[
            pl.BlockSpec((img_tile, C, hw_chunk), lambda i, k: (i, 0, k)),
            pl.BlockSpec((C, Di), lambda i, k: (0, 0),
                         pipeline_mode=pl.Buffered(1)),
            pl.BlockSpec((1, Di), lambda i, k: (0, 0),
                         pipeline_mode=pl.Buffered(1)),
            pl.BlockSpec((Di, Do), lambda i, k: (0, 0),
                         pipeline_mode=pl.Buffered(1)),
            pl.BlockSpec((1, Do), lambda i, k: (0, 0),
                         pipeline_mode=pl.Buffered(1)),
            pl.BlockSpec((Do, B), lambda i, k: (0, 0),      # resident txt_embT
                         pipeline_mode=pl.Buffered(1)),
        ],
        out_specs=pl.BlockSpec((img_tile, B), lambda i, k: (i, 0)),
        scratch_shapes=[pltpu.VMEM((img_tile, C, 128), f32)],
        compiler_params=cparams,
    )(images_r, params["w_feat"], params["b_feat"],
      params["w_img_proj"], params["b_img_proj"], txt_embT)

    return logits


# --------------------------------------------------------------------------
# Parameters (pre-transposed [in, out], padded to 128 lanes, bf16 weights)
# --------------------------------------------------------------------------
def init_params(key, C, D_img, D_txt, D_out, vocab):
    ks = jax.random.split(key, 6)
    s = 0.02
    Di = _round_up(D_img, 128)
    Dt = _round_up(D_txt, 128)
    Do = _round_up(D_out, 128)

    def pad2(x, r, c):
        out = jnp.zeros((r, c), x.dtype)
        return out.at[:x.shape[0], :x.shape[1]].set(x)

    w_feat = jax.random.normal(ks[0], (C, D_img), jnp.float32) * s
    tok_tab = jax.random.normal(ks[1], (vocab, D_txt), jnp.float32) * s
    w_ip = jax.random.normal(ks[2], (D_img, D_out), jnp.float32) * s
    b_ip = jax.random.normal(ks[3], (1, D_out), jnp.float32) * s
    w_tp = jax.random.normal(ks[4], (D_txt, D_out), jnp.float32) * s
    b_tp = jax.random.normal(ks[5], (1, D_out), jnp.float32) * s

    return {
        "dims": dict(C=C, D_img=D_img, D_txt=D_txt, D_out=D_out,
                     Di=Di, Dt=Dt, Do=Do),
        # stand-in image feature head (after global average pool); channel K
        # dim is read full-dim in the kernel (no image channel pad pre-pass).
        "w_feat": pad2(w_feat, C, Di).astype(jnp.bfloat16),
        "b_feat": jnp.zeros((1, Di), jnp.float32),
        # stand-in token embedding table
        "tok_emb_table": pad2(tok_tab, vocab, Dt).astype(jnp.bfloat16),
        # image_projection / text_projection (nn.Linear weights, pre-transposed)
        "w_img_proj": pad2(w_ip, Di, Do).astype(jnp.bfloat16),
        "b_img_proj": pad2(b_ip, 1, Do),
        "w_txt_proj": pad2(w_tp, Dt, Do).astype(jnp.bfloat16),
        "b_txt_proj": pad2(b_tp, 1, Do),
        # nn.Parameter(torch.tensor(0.07)) -- module multiplies logits by it
        "temperature": jnp.full((1, 1), 0.07, jnp.float32),
    }


if __name__ == "__main__":
    key = jax.random.PRNGKey(0)
    kp, ki, kt = jax.random.split(key, 3)

    # Small shapes consistent with the module's forward signature.
    B, C, H, W = 2, 4, 16, 16          # images: [B, C, H, W]
    S, vocab = 8, 100                  # input_ids / attention_mask: [B, S]
    D_img, D_txt, D_out = 64, 48, 32   # image/text embedding dims, output_dim

    params = init_params(kp, C, D_img, D_txt, D_out, vocab)
    images = jax.random.normal(ki, (B, C, H, W), jnp.float32)
    input_ids = jax.random.randint(kt, (B, S), 0, vocab, dtype=jnp.int32)
    attention_mask = jnp.ones((B, S), jnp.int32).at[:, -2:].set(0)

    logits = clip_forward(images, input_ids, attention_mask, params)
    jax.block_until_ready(logits)
    assert logits.shape == (B, B)
    assert bool(jnp.all(jnp.isfinite(logits)))
    print("KERNEL_OK")
</pallas_src>

<mosaic_0001>
module attributes {stable_mosaic.version = 11 : i64} {
  func.func @text_kernel(%arg0: i32, %arg1: i32, %arg2: memref<2x8x128xbf16, #tpu.memory_space<vmem>>, %arg3: memref<2x8xf32, #tpu.memory_space<vmem>>, %arg4: memref<128x128xbf16, #tpu.memory_space<vmem>>, %arg5: memref<1x128xf32, #tpu.memory_space<vmem>>, %arg6: memref<1x1xf32, #tpu.memory_space<smem>>, %arg7: memref<128x2xbf16, #tpu.memory_space<vmem>>, %arg8: memref<2x128xf32, #tpu.memory_space<vmem>>, %arg9: memref<2x1xf32, #tpu.memory_space<vmem>>) attributes {dimension_semantics = [#tpu.dimension_semantics<parallel>, #tpu.dimension_semantics<arbitrary>], iteration_bounds = array<i64: 1, 1>, scalar_prefetch = 0 : i64, scratch_operands = 2 : i64, tpu.core_type = #tpu.core_type<tc>, window_params = [{transform_indices = @transform_0, window_bounds = array<i64: 2, 8, 128>}, {transform_indices = @transform_1, window_bounds = array<i64: 2, 8>}, {pipeline_mode = #tpu.pipeline_mode<synchronous>, transform_indices = @transform_2, window_bounds = array<i64: 128, 128>}, {pipeline_mode = #tpu.pipeline_mode<synchronous>, transform_indices = @transform_3, window_bounds = array<i64: 1, 128>}, {transform_indices = @transform_4, window_bounds = array<i64: 1, 1>}, {transform_indices = @transform_5, window_bounds = array<i64: 128, 2>}]} {
    %c0_i32 = arith.constant 0 : i32
    %0 = arith.cmpi eq, %arg1, %c0_i32 : i32
    %1 = arith.extui %0 : i1 to i32
    %c0_i32_0 = arith.constant 0 : i32
    %2 = arith.cmpi ne, %1, %c0_i32_0 : i32
    scf.if %2 {
      %cst_16 = arith.constant 0.000000e+00 : f32
      %21 = vector.broadcast %cst_16 : f32 to vector<2x128xf32>
      %c0_17 = arith.constant 0 : index
      %c0_18 = arith.constant 0 : index
      %22 = vector.load %arg8[%c0_17, %c0_18] : memref<2x128xf32, #tpu.memory_space<vmem>>, vector<2x128xf32>
      tpu.vector_store %arg8[%c0_17, %c0_18], %21 {strides = array<i32>} : memref<2x128xf32, #tpu.memory_space<vmem>>, vector<2x128xf32>,
      %cst_19 = arith.constant 0.000000e+00 : f32
      %23 = vector.broadcast %cst_19 : f32 to vector<2x1xf32>
      %c0_20 = arith.constant 0 : index
      %c0_21 = arith.constant 0 : index
      %24 = vector.load %arg9[%c0_20, %c0_21] : memref<2x1xf32, #tpu.memory_space<vmem>>, vector<2x1xf32>
      tpu.vector_store %arg9[%c0_20, %c0_21], %23 {strides = array<i32>} : memref<2x1xf32, #tpu.memory_space<vmem>>, vector<2x1xf32>,
    } else {
    }
    %c0 = arith.constant 0 : index
    %c0_1 = arith.constant 0 : index
    %3 = vector.load %arg3[%c0, %c0_1] : memref<2x8xf32, #tpu.memory_space<vmem>>, vector<2x8xf32>
    %c0_2 = arith.constant 0 : index
    %c0_3 = arith.constant 0 : index
    %c0_4 = arith.constant 0 : index
    %4 = vector.load %arg2[%c0_2, %c0_3, %c0_4] : memref<2x8x128xbf16, #tpu.memory_space<vmem>>, vector<2x8x128xbf16>
    %5 = arith.extf %4 : vector<2x8x128xbf16> to vector<2x8x128xf32>
    %c0_5 = arith.constant 0 : index
    %c0_6 = arith.constant 0 : index
    %6 = vector.load %arg8[%c0_5, %c0_6] : memref<2x128xf32, #tpu.memory_space<vmem>>, vector<2x128xf32>
    %7 = vector.shape_cast %3 : vector<2x8xf32> to vector<2x8x1xf32>
    %8 = vector.broadcast %7 : vector<2x8x1xf32> to vector<2x8x128xf32>
    %9 = arith.mulf %5, %8 : vector<2x8x128xf32>
    %cst = arith.constant dense<0.000000e+00> : vector<2x128xf32>
    %10 = vector.multi_reduction <add>, %9, %cst [1] : vector<2x8x128xf32> to vector<2x128xf32>
    %11 = arith.addf %6, %10 : vector<2x128xf32>
    %c0_7 = arith.constant 0 : index
    %c0_8 = arith.constant 0 : index
    %12 = vector.load %arg8[%c0_7, %c0_8] : memref<2x128xf32, #tpu.memory_space<vmem>>, vector<2x128xf32>
    tpu.vector_store %arg8[%c0_7, %c0_8], %11 {strides = array<i32>} : memref<2x128xf32, #tpu.memory_space<vmem>>, vector<2x128xf32>,
    %c0_9 = arith.constant 0 : index
    %c0_10 = arith.constant 0 : index
    %13 = vector.load %arg9[%c0_9, %c0_10] : memref<2x1xf32, #tpu.memory_space<vmem>>, vector<2x1xf32>
    %cst_11 = arith.constant dense<0.000000e+00> : vector<2xf32>
    %14 = vector.multi_reduction <add>, %3, %cst_11 [1] : vector<2x8xf32> to vector<2xf32>
    %15 = vector.shape_cast %14 : vector<2xf32> to vector<2x1xf32>
    %16 = arith.addf %13, %15 : vector<2x1xf32>
    %c0_12 = arith.constant 0 : index
    %c0_13 = arith.constant 0 : index
    %17 = vector.load %arg9[%c0_12, %c0_13] : memref<2x1xf32, #tpu.memory_space<vmem>>, vector<2x1xf32>
    tpu.vector_store %arg9[%c0_12, %c0_13], %16 {strides = array<i32>} : memref<2x1xf32, #tpu.memory_space<vmem>>, vector<2x1xf32>,
    %c0_i32_14 = arith.constant 0 : i32
    %18 = arith.cmpi eq, %arg1, %c0_i32_14 : i32
    %19 = arith.extui %18 : i1 to i32
    %c0_i32_15 = arith.constant 0 : i32
    %20 = arith.cmpi ne, %19, %c0_i32_15 : i32
    scf.if %20 {
      %c0_16 = arith.constant 0 : index
      %c0_17 = arith.constant 0 : index
      %21 = vector.load %arg8[%c0_16, %c0_17] : memref<2x128xf32, #tpu.memory_space<vmem>>, vector<2x128xf32>
      %c0_18 = arith.constant 0 : index
      %c0_19 = arith.constant 0 : index
      %22 = vector.load %arg9[%c0_18, %c0_19] : memref<2x1xf32, #tpu.memory_space<vmem>>, vector<2x1xf32>
      %cst_20 = arith.constant 9.99999971E-10 : f32
      %23 = vector.broadcast %cst_20 : f32 to vector<2x1xf32>
      %24 = arith.maximumf %22, %23 : vector<2x1xf32>
      %25 = vector.broadcast %24 : vector<2x1xf32> to vector<2x128xf32>
      %26 = arith.divf %21, %25 : vector<2x128xf32>
      %27 = arith.truncf %26 : vector<2x128xf32> to vector<2x128xbf16>
      %c0_21 = arith.constant 0 : index
      %c0_22 = arith.constant 0 : index
      %28 = vector.load %arg4[%c0_21, %c0_22] : memref<128x128xbf16, #tpu.memory_space<vmem>>, vector<128x128xbf16>
      %cst_23 = arith.constant dense<0.000000e+00> : vector<2x128xf32>
      %29 = tpu.matmul %27, %28, %cst_23 {dimension_numbers = #tpu.dot_dimension_numbers<[1], [0], [0], [1], [0, 0, 1, 1], [], []>} : vector<2x128xbf16>, vector<128x128xbf16>, vector<2x128xf32> -> vector<2x128xf32>
      %c0_24 = arith.constant 0 : index
      %c0_25 = arith.constant 0 : index
      %30 = vector.load %arg5[%c0_24, %c0_25] : memref<1x128xf32, #tpu.memory_space<vmem>>, vector<1x128xf32>
      %31 = vector.broadcast %30 : vector<1x128xf32> to vector<2x128xf32>
      %32 = arith.addf %29, %31 : vector<2x128xf32>
      %33 = arith.mulf %32, %32 : vector<2x128xf32>
      %cst_26 = arith.constant dense<0.000000e+00> : vector<2xf32>
      %34 = vector.multi_reduction <add>, %33, %cst_26 [1] : vector<2x128xf32> to vector<2xf32>
      %35 = vector.shape_cast %34 : vector<2xf32> to vector<2x1xf32>
      %cst_27 = arith.constant 1.000000e-24 : f32
      %36 = vector.broadcast %cst_27 : f32 to vector<2x1xf32>
      %37 = arith.maximumf %35, %36 : vector<2x1xf32>
      %38 = math.rsqrt %37 : vector<2x1xf32>
      %39 = vector.broadcast %38 : vector<2x1xf32> to vector<2x128xf32>
      %40 = arith.mulf %32, %39 : vector<2x128xf32>
      %c0_28 = arith.constant 0 : index
      %c0_29 = arith.constant 0 : index
      %41 = memref.load %arg6[%c0_28, %c0_29] : memref<1x1xf32, #tpu.memory_space<smem>>
      %42 = vector.broadcast %41 : f32 to vector<2x128xf32>
      %43 = arith.mulf %40, %42 : vector<2x128xf32>
      %44 = tpu.transpose %43, [1, 0] : vector<2x128xf32> -> vector<128x2xf32>
      %45 = arith.truncf %44 : vector<128x2xf32> to vector<128x2xbf16>
      %c0_30 = arith.constant 0 : index
      %c0_31 = arith.constant 0 : index
      %46 = vector.load %arg7[%c0_30, %c0_31] : memref<128x2xbf16, #tpu.memory_space<vmem>>, vector<128x2xbf16>
      tpu.vector_store %arg7[%c0_30, %c0_31], %45 {strides = array<i32>} : memref<128x2xbf16, #tpu.memory_space<vmem>>, vector<128x2xbf16>,
    } else {
    }
    return
  }
  func.func @transform_0(%arg0: i32, %arg1: i32) -> (i32, i32, i32) {
    %c0_i32 = arith.constant 0 : i32
    %c0_i32_0 = arith.constant 0 : i32
    return %arg0, %arg1, %c0_i32 : i32, i32, i32
  }
  func.func @transform_1(%arg0: i32, %arg1: i32) -> (i32, i32) {
    %c0_i32 = arith.constant 0 : i32
    return %arg0, %arg1 : i32, i32
  }
  func.func @transform_2(%arg0: i32, %arg1: i32) -> (i32, i32) {
    %c0_i32 = arith.constant 0 : i32
    %c0_i32_0 = arith.constant 0 : i32
    %c0_i32_1 = arith.constant 0 : i32
    return %c0_i32, %c0_i32_0 : i32, i32
  }
  func.func @transform_3(%arg0: i32, %arg1: i32) -> (i32, i32) {
    %c0_i32 = arith.constant 0 : i32
    %c0_i32_0 = arith.constant 0 : i32
    %c0_i32_1 = arith.constant 0 : i32
    return %c0_i32, %c0_i32_0 : i32, i32
  }
  func.func @transform_4(%arg0: i32, %arg1: i32) -> (i32, i32) {
    %c0_i32 = arith.constant 0 : i32
    %c0_i32_0 = arith.constant 0 : i32
    %c0_i32_1 = arith.constant 0 : i32
    return %c0_i32, %c0_i32_0 : i32, i32
  }
  func.func @transform_5(%arg0: i32, %arg1: i32) -> (i32, i32) {
    %c0_i32 = arith.constant 0 : i32
    %c0_i32_0 = arith.constant 0 : i32
    return %c0_i32, %arg0 : i32, i32
  }
}

</mosaic_0001>

<llo_original>
// kernel: tpu_custom_call.1
$region0: #{tpu_custom_call.1}
  #allocation0 [shape = 'u32[]', space=smem, size = 0x4, offset = 0x4, fixed_abs, tag = 'smem constant byte address 0x4 - core index']
  #allocation1 [shape = 'u32[144,128]{1,0:T(1,128)}', space=vmem, size = 0x12000, scoped, tag = 'internal scratch']
  #allocation2 [shape = 'f32[2,128]{1,0:T(2,128)}', space=vmem, size = 0x400, scoped, tag = 'scratch operand']
  #allocation3 [shape = 'f32[2,1]{1,0:T(2,128)}', space=vmem, size = 0x400, scoped, tag = 'scratch operand']
  #allocation4 [shape = 'f32[1,1]{1,0:T(1,128)S(6)}', space=smem, size = 0x200, scoped, tag = 'scoped memory for tpu_custom_call.1']
  %s0 = inlined_call_operand.hbm [shape: bf16[2,8,128], index: 0, kind: input, shape index: {}]
  %s1 = inlined_call_operand.vmem [shape: f32[2,8], index: 1, kind: input, shape index: {}]
  %s2 = inlined_call_operand.hbm [shape: bf16[128,128], index: 2, kind: input, shape index: {}]
  %s3 = inlined_call_operand.vmem [shape: f32[1,128], index: 3, kind: input, shape index: {}]
  %s4 = inlined_call_operand.<no memory space> [shape: f32[1,1], index: 4, kind: input, shape index: {}]
  %s5 = inlined_call_operand.vmem [shape: bf16[128,2], index: 5, kind: output, shape index: {}]
  %s6 = sld [smem:[#allocation0]]
  $region46: #{tpu_custom_call.1} parent=0
    _
  %s8 = ssub.s32 1, %s6
  %s9 = scalar_select 0, %s8, %s6
  %10 = sst [smem:[#allocation4]] %s4
  $region1: #{tpu_custom_call.1} parent=0
    #allocation5 [shape = 'u8[4096]{0}', space=vmem, size = 0x1000, scoped, tag = 'input window, operand 0, single buffered']
    #allocation6 [shape = 's32[1]{0}', space=sflag, size = 0x4, scoped, tag = 'scoped memory for tpu_custom_call.1']
    #allocation7 [shape = 'u8[32768]{0}', space=vmem, size = 0x8000, scoped, tag = 'input window, operand 2, single buffered']
    #allocation8 [shape = 's32[1]{0}', space=sflag, size = 0x4, scoped, tag = 'scoped memory for tpu_custom_call.1']
    %11 = vsyncpa [#allocation6], 0
    %12 = vsyncpa [#allocation8], 0
    // Predicated region
    $region2: #{tpu_custom_call.1} parent=1 // pred_check
      _
    $region3: #{tpu_custom_call.1} parent=1 // pred_check_branch
      %14 = sbr.rel (0) target = $region5
    $region4: #{tpu_custom_call.1} parent=1 // pred_region
      %s16 = ssub.s32 128, 128
      %17 = vsyncadd [#allocation6], %s16
      %s18 = sshll.u32 [#allocation5], 4
      %s19 = int_to_ptr.vmem [resolvable:$true] %s18
      %24 = dma.hbm_to_vmem [thread:$0]  %s0, 128, %s19, [#allocation6], 64, 64, 4
    $region5: #{tpu_custom_call.1} parent=1 // pred_fallthru
      _
    // Predicated region
    $region6: #{tpu_custom_call.1} parent=1 // pred_check
      _
    $region7: #{tpu_custom_call.1} parent=1 // pred_check_branch
      %26 = sbr.rel (0) target = $region9
    $region8: #{tpu_custom_call.1} parent=1 // pred_region
      _
    $region9: #{tpu_custom_call.1} parent=1 // pred_fallthru
      _
    // Predicated region
    $region10: #{tpu_custom_call.1} parent=1 // pred_check
      _
    $region11: #{tpu_custom_call.1} parent=1 // pred_check_branch
      %28 = sbr.rel (0) target = $region13
    $region12: #{tpu_custom_call.1} parent=1 // pred_region
      %s30 = ssub.s32 1024, 1024
      %31 = vsyncadd [#allocation8], %s30
      %s32 = sshll.u32 [#allocation7], 4
      %s33 = int_to_ptr.vmem [resolvable:$true] %s32
      %38 = dma.hbm_to_vmem [thread:$0]  %s2, 1024, %s33, [#allocation8], 64, 64, 4
    $region13: #{tpu_custom_call.1} parent=1 // pred_fallthru
      _
    // Predicated region
    $region14: #{tpu_custom_call.1} parent=1 // pred_check
      _
    $region15: #{tpu_custom_call.1} parent=1 // pred_check_branch
      %40 = sbr.rel (0) target = $region17
    $region16: #{tpu_custom_call.1} parent=1 // pred_region
      _
    $region17: #{tpu_custom_call.1} parent=1 // pred_fallthru
      _
    // Predicated region
    $region18: #{tpu_custom_call.1} parent=1 // pred_check
      _
    $region19: #{tpu_custom_call.1} parent=1 // pred_check_branch
      %42 = sbr.rel (0) target = $region21
    $region20: #{tpu_custom_call.1} parent=1 // pred_region
      _
    $region21: #{tpu_custom_call.1} parent=1 // pred_fallthru
      _
    // Predicated region
    $region22: #{tpu_custom_call.1} parent=1 // pred_check
      _
    $region23: #{tpu_custom_call.1} parent=1 // pred_check_branch
      %44 = sbr.rel (0) target = $region25
    $region24: #{tpu_custom_call.1} parent=1 // pred_region
      %45 = dma.done [#allocation6], 128
    $region25: #{tpu_custom_call.1} parent=1 // pred_fallthru
      _
    // Predicated region
    $region26: #{tpu_custom_call.1} parent=1 // pred_check
      _
    $region27: #{tpu_custom_call.1} parent=1 // pred_check_branch
      %47 = sbr.rel (0) target = $region29
    $region28: #{tpu_custom_call.1} parent=1 // pred_region
      %48 = dma.done [#allocation8], 1024
    $region29: #{tpu_custom_call.1} parent=1 // pred_fallthru
      _
    %p50 = scmp.eq.s32.totalorder 0, 0
    // Predicated region
    $region30: #{tpu_custom_call.1} parent=1 // pred_check
      %p51 = pneg %p50
    $region31: #{tpu_custom_call.1} parent=1 // pred_check_branch
      %53 = sbr.rel (%p51) target = $region33
    $region32: #{tpu_custom_call.1} parent=1 // pred_region
      %54 = vst [vmem:[#allocation2] sm:$0x3] 0.0
      %vm55 = vcmask 1024
      %56 = vst.msk [vmem:[#allocation3] sm:$0x3] %vm55, 0.0
    $region33: #{tpu_custom_call.1} parent=1 // pred_fallthru
      _
    %v57 = vld [vmem:[%s1] sm:$0x3]
    %v58 = vld [vmem:[#allocation5] sm:$0xf]
    %v59 = vld [vmem:[#allocation5 + $0x4] sm:$0xf]
    %v60 = vunpack.c.l.bf16 %v58
    %v61 = vunpack.c.l.bf16 %v59
    %v62 = vld [vmem:[#allocation2] sm:$0x3]
    %v63 = vlaneseq
    %v64 = vshrl.u32 %v63, 7
    %v65 = vsub.s32 0, %v64
    %v66 = vrot.slane %v57, %v65
    %68 = vbcast.lane.b32.xlu0 %v66, 256
    %v69 = vpop.permute.xlu0 %68
    %v70 = vlaneseq
    %v71 = vshrl.u32 %v70, 7
    %v72 = vsub.s32 1, %v71
    %v73 = vrot.slane %v57, %v72
    %75 = vbcast.lane.b32.xlu0 %v73, 256
    %v76 = vpop.permute.xlu0 %75
    %v77 = vmul.f32 %v60, %v69
    %v78 = vmul.f32 %v61, %v76
    %v79 = vrot.slane %v77, 4
    %v80 = vadd.f32 %v77, %v79
    %v81 = vrot.slane %v80, 2
    %v82 = vadd.f32 %v80, %v81
    %v83 = vrot.slane %v82, 1
    %v84 = vadd.f32 %v82, %v83
    %v85 = vrot.slane %v78, 4
    %v86 = vadd.f32 %v78, %v85
    %v87 = vrot.slane %v86, 2
    %v88 = vadd.f32 %v86, %v87
    %v89 = vrot.slane %v88, 1
    %v90 = vadd.f32 %v88, %v89
    %vm93 = vcmask 1041409
    %v94 = vsel %vm93, %v90, %v84
    %v96 = vadd.f32 %v62, %v94
    %97 = vst [vmem:[#allocation2] sm:$0x3] %v96
    %v98 = vld [vmem:[#allocation3] sm:$0x3]
    %vm99 = vcmask 58368
    %v100 = vsel %vm99, %v57, 0.0
    %101 = vadd.xlane.f32.xlu0 %v100
    %v102 = vpop.xlane.xlu0 %101
    %v103 = vadd.f32 %v98, %v102
    %vm104 = vcmask 1024
    %105 = vst.msk [vmem:[#allocation3] sm:$0x3] %vm104, %v103
    // Predicated region
    $region34: #{tpu_custom_call.1} parent=1 // pred_check
      %p106 = pneg %p50
    $region35: #{tpu_custom_call.1} parent=1 // pred_check_branch
      %108 = sbr.rel (%p106) target = $region37
    $region36: #{tpu_custom_call.1} parent=1 // pred_region
      %v109 = vld [vmem:[#allocation2] sm:$0x3]
      %v110 = vld [vmem:[#allocation3] sm:$0x3]
      %v111 = vmax.f32 %v110, 1e-09
      %113 = vset.pattern.permute.xlu0 0
      %114 = vperm.xlu0 %113, %v111
      %v115 = vpop.permute.xlu0 %114
      %v117 = vrcp.pop %v115
      %v118 = vmul.f32 %v109, %v117
      %v119 = vpack.c.bf16 %v118, %v118
      %v120 = vld [vmem:[#allocation7] sm:$0xf]
      %v121 = vld [vmem:[#allocation7 + $0x4] sm:$0xf]
      %v122 = vld [vmem:[#allocation7 + $0x8] sm:$0xf]
      %v123 = vld [vmem:[#allocation7 + $0xc] sm:$0xf]
      %v124 = vld [vmem:[#allocation7 + $0x10] sm:$0xf]
      %v125 = vld [vmem:[#allocation7 + $0x14] sm:$0xf]
      %v126 = vld [vmem:[#allocation7 + $0x18] sm:$0xf]
      %v127 = vld [vmem:[#allocation7 + $0x1c] sm:$0xf]
      %v128 = vld [vmem:[#allocation7 + $0x20] sm:$0xf]
      %v129 = vld [vmem:[#allocation7 + $0x24] sm:$0xf]
      %v130 = vld [vmem:[#allocation7 + $0x28] sm:$0xf]
      %v131 = vld [vmem:[#allocation7 + $0x2c] sm:$0xf]
      %v132 = vld [vmem:[#allocation7 + $0x30] sm:$0xf]
      %v133 = vld [vmem:[#allocation7 + $0x34] sm:$0xf]
      %v134 = vld [vmem:[#allocation7 + $0x38] sm:$0xf]
      %v135 = vld [vmem:[#allocation7 + $0x3c] sm:$0xf]
      %v136 = vld [vmem:[%s3] sm:$0x1]
      %v138 = vlaneseq
      %v139 = vshrl.u32 %v138, 7
      %v140 = vsub.s32 0, %v139
      %v141 = vrot.slane %v136, %v140
      %v159 = vunpack.c.l.b16 %v120
      %v160 = vunpack.c.l.b16 %v121
      %v161 = vunpack.c.l.b16 %v122
      %v162 = vunpack.c.l.b16 %v123
      %v163 = vunpack.c.l.b16 %v124
      %v164 = vunpack.c.l.b16 %v125
      %v165 = vunpack.c.l.b16 %v126
      %v166 = vunpack.c.l.b16 %v127
      %v167 = vunpack.c.l.b16 %v128
      %v168 = vunpack.c.l.b16 %v129
      %v169 = vunpack.c.l.b16 %v130
      %v170 = vunpack.c.l.b16 %v131
      %v171 = vunpack.c.l.b16 %v132
      %v172 = vunpack.c.l.b16 %v133
      %v173 = vunpack.c.l.b16 %v134
      %v174 = vunpack.c.l.b16 %v135
      %v175 = vpack.c.b16 %v160, %v159
      %v176 = vpack.c.b16 %v162, %v161
      %v177 = vpack.c.b16 %v164, %v163
      %v178 = vpack.c.b16 %v166, %v165
      %v179 = vpack.c.b16 %v168, %v167
      %v180 = vpack.c.b16 %v170, %v169
      %v181 = vpack.c.b16 %v172, %v171
      %v182 = vpack.c.b16 %v174, %v173
      %191 = vmatprep.subr.bf16.mxu0 0
      %192 = vmatpush1.bf16.msra.mxu0 %v175
      %193 = vmatprep.subr.bf16.mxu0 0
      %194 = vmatpush1.bf16.msra.mxu0 %v176
      %195 = vmatprep.subr.bf16.mxu0 0
      %196 = vmatpush1.bf16.msra.mxu0 %v177
      %197 = vmatprep.subr.bf16.mxu0 0
      %198 = vmatpush1.bf16.msra.mxu0 %v178
      %199 = vmatprep.subr.bf16.mxu0 0
      %200 = vmatpush1.bf16.msra.mxu0 %v179
      %201 = vmatprep.subr.bf16.mxu0 0
      %202 = vmatpush1.bf16.msra.mxu0 %v180
      %203 = vmatprep.subr.bf16.mxu0 0
      %204 = vmatpush1.bf16.msra.mxu0 %v181
      %205 = vmatprep.subr.bf16.mxu0 0
      %206 = vmatpush1.bf16.msra.mxu0 %v182
      %207 = vmatprep.subr.bf16.mxu0 0
      %208 = vmatpush1.bf16.msra.mxu0 0
      %209 = vmatprep.subr.bf16.mxu0 0
      %210 = vmatpush1.bf16.msra.mxu0 0
      %211 = vmatprep.subr.bf16.mxu0 0
      %212 = vmatpush1.bf16.msra.mxu0 0
      %213 = vmatprep.subr.bf16.mxu0 0
      %214 = vmatpush1.bf16.msra.mxu0 0
      %215 = vmatprep.subr.bf16.mxu0 0
      %216 = vmatpush1.bf16.msra.mxu0 0
      %217 = vmatprep.subr.bf16.mxu0 0
      %218 = vmatpush1.bf16.msra.mxu0 0
      %219 = vmatprep.subr.bf16.mxu0 0
      %220 = vmatpush1.bf16.msra.mxu0 0
      %221 = vmatprep.subr.bf16.mxu0 0
      %222 = vmatpush1.bf16.msra.mxu0 0
      %223 = vmatprep.mubr.bf16.mxu0 0
      %224 = vmatmul.mubr.bf16.gmra.mrb[0].mxu0 %v119
      %v225 = vpop.f32.mrb[0].mxu0
      %v226 = vadd.f32 %v141, %v225
      %v227 = vpop.f32.mrb[0].mxu0
      %v228 = vpop.f32.mrb[0].mxu0
      %v229 = vpop.f32.mrb[0].mxu0
      %230 = vdwg.mxu0
      %v231 = vmul.f32 %v226, %v226
      %vm232 = vcmask 1041408
      %v233 = vsel %vm232, %v231, 0.0
      %234 = vadd.xlane.f32.xlu0 %v233
      %v235 = vpop.xlane.xlu0 %234
      %v236 = vmax.f32 %v235, 1e-24
      %v237 = vrsqrt.pop %v236
      %v238 = vmul.f32 %v226, %v237
      %s239 = sld [smem:[#allocation4]]
      %v240 = vstv %s239
      %v241 = vmul.f32 %v238, %v240
      %242 = vxpose.xlu0.b32.start [1/16] %v241, 128
      %243 = vxpose.xlu0.b32.cont [2/16] 0.0, 128
      %244 = vxpose.xlu0.b32.cont [3/16] 0.0, 128
      %245 = vxpose.xlu0.b32.cont [4/16] 0.0, 128
      %246 = vxpose.xlu0.b32.cont [5/16] 0.0, 128
      %247 = vxpose.xlu0.b32.cont [6/16] 0.0, 128
      %248 = vxpose.xlu0.b32.cont [7/16] 0.0, 128
      %249 = vxpose.xlu0.b32.cont [8/16] 0.0, 128
      %250 = vxpose.xlu0.b32.cont [9/16] 0.0, 128
      %251 = vxpose.xlu0.b32.cont [10/16] 0.0, 128
      %252 = vxpose.xlu0.b32.cont [11/16] 0.0, 128
      %253 = vxpose.xlu0.b32.cont [12/16] 0.0, 128
      %254 = vxpose.xlu0.b32.cont [13/16] 0.0, 128
      %255 = vxpose.xlu0.b32.cont [14/16] 0.0, 128
      %256 = vxpose.xlu0.b32.cont [15/16] 0.0, 128
      %257 = vxpose.xlu0.b32.end [16/16] 0.0, 128
      %v258 = vpop.trf.xlu0
      %v259 = vpop.trf.xlu0
      %v260 = vpop.trf.xlu0
      %v261 = vpop.trf.xlu0
      %v262 = vpop.trf.xlu0
      %v263 = vpop.trf.xlu0
      %v264 = vpop.trf.xlu0
      %v265 = vpop.trf.xlu0
      %v266 = vpop.trf.xlu0
      %v267 = vpop.trf.xlu0
      %v268 = vpop.trf.xlu0
      %v269 = vpop.trf.xlu0
      %v270 = vpop.trf.xlu0
      %v271 = vpop.trf.xlu0
      %v272 = vpop.trf.xlu0
      %v273 = vpop.trf.xlu0
      %v274 = vpack.c.bf16 %v259, %v258
      %v275 = vpack.c.bf16 %v261, %v260
      %v276 = vpack.c.bf16 %v263, %v262
      %v277 = vpack.c.bf16 %v265, %v264
      %v278 = vpack.c.bf16 %v267, %v266
      %v279 = vpack.c.bf16 %v269, %v268
      %v280 = vpack.c.bf16 %v271, %v270
      %v281 = vpack.c.bf16 %v273, %v272
      %v290 = vunpack.c.l.b16 %v274
      %v291 = vunpack.c.h.b16 %v274
      %v292 = vunpack.c.l.b16 %v275
      %v293 = vunpack.c.h.b16 %v275
      %v294 = vunpack.c.l.b16 %v276
      %v295 = vunpack.c.h.b16 %v276
      %v296 = vunpack.c.l.b16 %v277
      %v297 = vunpack.c.h.b16 %v277
      %v298 = vunpack.c.l.b16 %v278
      %v299 = vunpack.c.h.b16 %v278
      %v300 = vunpack.c.l.b16 %v279
      %v301 = vunpack.c.h.b16 %v279
      %v302 = vunpack.c.l.b16 %v280
      %v303 = vunpack.c.h.b16 %v280
      %v304 = vunpack.c.l.b16 %v281
      %v305 = vunpack.c.h.b16 %v281
      %v306 = vpack.c.b16 %v290, %v290
      %v307 = vpack.c.b16 %v291, %v291
      %v308 = vpack.c.b16 %v292, %v292
      %v309 = vpack.c.b16 %v293, %v293
      %v310 = vpack.c.b16 %v294, %v294
      %v311 = vpack.c.b16 %v295, %v295
      %v312 = vpack.c.b16 %v296, %v296
      %v313 = vpack.c.b16 %v297, %v297
      %v314 = vpack.c.b16 %v298, %v298
      %v315 = vpack.c.b16 %v299, %v299
      %v316 = vpack.c.b16 %v300, %v300
      %v317 = vpack.c.b16 %v301, %v301
      %v318 = vpack.c.b16 %v302, %v302
      %v319 = vpack.c.b16 %v303, %v303
      %v320 = vpack.c.b16 %v304, %v304
      %v321 = vpack.c.b16 %v305, %v305
      %vm338 = vcmask 11264
      %339 = vst.msk [vmem:[%s5] sm:$0xf] %vm338, %v306
      %340 = vst.msk [vmem:[%s5 + $0x4] sm:$0xf] %vm338, %v307
      %341 = vst.msk [vmem:[%s5 + $0x8] sm:$0xf] %vm338, %v308
      %342 = vst.msk [vmem:[%s5 + $0xc] sm:$0xf] %vm338, %v309
      %343 = vst.msk [vmem:[%s5 + $0x10] sm:$0xf] %vm338, %v310
      %344 = vst.msk [vmem:[%s5 + $0x14] sm:$0xf] %vm338, %v311
      %345 = vst.msk [vmem:[%s5 + $0x18] sm:$0xf] %vm338, %v312
      %346 = vst.msk [vmem:[%s5 + $0x1c] sm:$0xf] %vm338, %v313
      %347 = vst.msk [vmem:[%s5 + $0x20] sm:$0xf] %vm338, %v314
      %348 = vst.msk [vmem:[%s5 + $0x24] sm:$0xf] %vm338, %v315
      %349 = vst.msk [vmem:[%s5 + $0x28] sm:$0xf] %vm338, %v316
      %350 = vst.msk [vmem:[%s5 + $0x2c] sm:$0xf] %vm338, %v317
      %351 = vst.msk [vmem:[%s5 + $0x30] sm:$0xf] %vm338, %v318
      %352 = vst.msk [vmem:[%s5 + $0x34] sm:$0xf] %vm338, %v319
      %353 = vst.msk [vmem:[%s5 + $0x38] sm:$0xf] %vm338, %v320
      %354 = vst.msk [vmem:[%s5 + $0x3c] sm:$0xf] %vm338, %v321
    $region37: #{tpu_custom_call.1} parent=1 // pred_fallthru
      _
    // Predicated region
    $region38: #{tpu_custom_call.1} parent=1 // pred_check
      _
    $region39: #{tpu_custom_call.1} parent=1 // pred_check_branch
      %356 = sbr.rel (0) target = $region41
    $region40: #{tpu_custom_call.1} parent=1 // pred_region
      _
    $region41: #{tpu_custom_call.1} parent=1 // pred_fallthru
      _
    // Predicated region
    $region42: #{tpu_custom_call.1} parent=1 // pred_check
      _
    $region43: #{tpu_custom_call.1} parent=1 // pred_check_branch
      %358 = sbr.rel (0) target = $region45
    $region44: #{tpu_custom_call.1} parent=1 // pred_region
      _
    $region45: #{tpu_custom_call.1} parent=1 // pred_fallthru
      _
    %359 = vsyncpa [#allocation6], 1
    %360 = vsyncpa [#allocation8], 1

</llo_original>
